<compile_context>
chip_gen: v5e
topology: v5e:2x2
jax: 0.10.0
libtpu: 0.0.40
codegen_flags: <defaults>
</compile_context>

<pallas_src>
import math
import functools

import jax
import jax.numpy as jnp
from jax import lax
from jax.experimental import pallas as pl
from jax.experimental.pallas import tpu as pltpu

LN_EPS = 1e-5
_VMEM_LIMIT = 32 * 1024 * 1024  # explicit cap; fits v5e/v6e/v7x scoped budgets


# ------------------------- attention block kernel ---------------------------
def _attn_block_kernel(x_ref, g1_ref, beta1_ref, wqkv_ref, bqkv_ref,
                       wproj_ref, bproj_ref, o_ref, *, n_head, head_size):
    E = n_head * head_size
    x = x_ref[0]                                            # (S, E) f32
    S = x.shape[0]

    # ---- LayerNorm 1 (f32) ----
    mu = jnp.mean(x, axis=-1, keepdims=True)
    var = jnp.mean(jnp.square(x - mu), axis=-1, keepdims=True)
    xn = (x - mu) * lax.rsqrt(var + LN_EPS)
    xn = xn * g1_ref[...] + beta1_ref[...]

    # ---- fused QKV projection: one lane-dense (S,E)@(E,3E) bf16 MXU matmul ----
    qkv = jnp.dot(xn.astype(jnp.bfloat16), wqkv_ref[...],
                  preferred_element_type=jnp.float32) + bqkv_ref[...]   # (S,3E) f32
    # fold 1/sqrt(D) into q: O(S*D) VPU work instead of O(S*S)
    q = qkv[:, 0:E] * jnp.float32(1.0 / math.sqrt(head_size))
    k = qkv[:, E:2 * E]
    v = qkv[:, 2 * E:3 * E]

    q16 = q.astype(jnp.bfloat16)
    k16 = k.astype(jnp.bfloat16)
    v16 = v.astype(jnp.bfloat16)

    row = lax.broadcasted_iota(jnp.int32, (S, S), 0)
    col = lax.broadcasted_iota(jnp.int32, (S, S), 1)
    causal = col <= row
    neg_inf = jnp.float32(float("-inf"))

    # contract the D axis of both operands directly (no k.T / XLU transpose)
    dnums = (((1,), (1,)), ((), ()))

    head_outs = []
    for h in range(n_head):                                 # short, unrolled
        sl = slice(h * head_size, (h + 1) * head_size)
        s_h = lax.dot_general(q16[:, sl], k16[:, sl], dnums,
                              preferred_element_type=jnp.float32)       # (S,S)
        # mask-then-scale order matches PyTorch (-inf stays -inf; scale in q)
        s_h = jnp.where(causal, s_h, neg_inf)
        m = jnp.max(s_h, axis=-1, keepdims=True)
        e = jnp.exp(s_h - m)                                # f32 softmax math
        p = e * pl.reciprocal(jnp.sum(e, axis=-1, keepdims=True), approx=True)
        head_outs.append(jnp.dot(p.astype(jnp.bfloat16), v16[:, sl],
                                 preferred_element_type=jnp.float32))   # (S,D)

    att = jnp.concatenate(head_outs, axis=-1)               # (S,E) lane-dense

    proj = jnp.dot(att.astype(jnp.bfloat16), wproj_ref[...],
                   preferred_element_type=jnp.float32) + bproj_ref[...]
    o_ref[0] = (x + proj).astype(o_ref.dtype)               # residual in f32


def _attention_block(x, p, n_head):
    B, S, E = x.shape
    D = E // n_head
    kernel = functools.partial(_attn_block_kernel, n_head=n_head, head_size=D)
    return pl.pallas_call(
        kernel,
        out_shape=jax.ShapeDtypeStruct((B, S, E), jnp.float32),
        grid_spec=pltpu.PrefetchScalarGridSpec(
            num_scalar_prefetch=0,
            grid=(B,),
            in_specs=[
                pl.BlockSpec((1, S, E),   lambda b: (b, 0, 0)),   # x
                pl.BlockSpec((1, E),      lambda b: (0, 0)),      # ln1 gamma
                pl.BlockSpec((1, E),      lambda b: (0, 0)),      # ln1 beta
                pl.BlockSpec((E, 3 * E),  lambda b: (0, 0)),      # W_qkv (bf16)
                pl.BlockSpec((1, 3 * E),  lambda b: (0, 0)),      # b_qkv
                pl.BlockSpec((E, E),      lambda b: (0, 0)),      # W_proj (bf16)
                pl.BlockSpec((1, E),      lambda b: (0, 0)),      # b_proj
            ],
            out_specs=pl.BlockSpec((1, S, E), lambda b: (b, 0, 0)),
        ),
        compiler_params=pltpu.CompilerParams(
            dimension_semantics=("parallel",),
            vmem_limit_bytes=_VMEM_LIMIT,
        ),
    )(x,
      p["ln1_g"].reshape(1, E), p["ln1_b"].reshape(1, E),
      p["w_qkv"].astype(jnp.bfloat16), p["b_qkv"].reshape(1, 3 * E),
      p["w_proj"].astype(jnp.bfloat16), p["b_proj"].reshape(1, E))


# ----------------------------- FFN block kernel ------------------------------
def _ffn_block_kernel(x_ref, g2_ref, beta2_ref, w1_ref, b1_ref, w2_ref, b2_ref,
                      o_ref):
    x = x_ref[...]                                          # (TM, E) f32

    # ---- LayerNorm 2 (f32) ----
    mu = jnp.mean(x, axis=-1, keepdims=True)
    var = jnp.mean(jnp.square(x - mu), axis=-1, keepdims=True)
    xn = (x - mu) * lax.rsqrt(var + LN_EPS)
    xn = xn * g2_ref[...] + beta2_ref[...]

    h = jnp.dot(xn.astype(jnp.bfloat16), w1_ref[...],
                preferred_element_type=jnp.float32) + b1_ref[...]       # (TM,4E)
    # tanh-approx GELU (tanh runs on the EUP).
    # TODO(synk): nn.GELU() default is the exact erf form; tanh approx deviates <~1e-3.
    h = 0.5 * h * (1.0 + jnp.tanh(0.7978845608028654 * (h + 0.044715 * h * h * h)))
    y = jnp.dot(h.astype(jnp.bfloat16), w2_ref[...],
                preferred_element_type=jnp.float32) + b2_ref[...]       # (TM,E)
    o_ref[...] = (x + y).astype(o_ref.dtype)                # residual in f32


def _pick_row_tile(m, cap=256):
    """Largest multiple of 8 dividing m, capped; aims for >=2 grid steps."""
    target = min(cap, max(8, m // 2))
    for tm in range(target, 7, -1):
        if m % tm == 0 and tm % 8 == 0:
            return tm
    return m


def _ffn_block(x, p):
    B, S, E = x.shape
    M = B * S
    H4 = p["w1"].shape[1]
    x2 = x.reshape(M, E)                                    # free reshape, no transpose
    TM = _pick_row_tile(M)
    out2 = pl.pallas_call(
        _ffn_block_kernel,
        out_shape=jax.ShapeDtypeStruct((M, E), jnp.float32),
        grid_spec=pltpu.PrefetchScalarGridSpec(
            num_scalar_prefetch=0,
            grid=(M // TM,),
            in_specs=[
                pl.BlockSpec((TM, E),  lambda i: (i, 0)),   # x rows
                pl.BlockSpec((1, E),   lambda i: (0, 0)),   # ln2 gamma
                pl.BlockSpec((1, E),   lambda i: (0, 0)),   # ln2 beta
                pl.BlockSpec((E, H4),  lambda i: (0, 0)),   # W1 (bf16), resident
                pl.BlockSpec((1, H4),  lambda i: (0, 0)),   # b1
                pl.BlockSpec((H4, E),  lambda i: (0, 0)),   # W2 (bf16), resident
                pl.BlockSpec((1, E),   lambda i: (0, 0)),   # b2
            ],
            out_specs=pl.BlockSpec((TM, E), lambda i: (i, 0)),
        ),
        compiler_params=pltpu.CompilerParams(
            dimension_semantics=("parallel",),
            vmem_limit_bytes=_VMEM_LIMIT,
        ),
    )(x2,
      p["ln2_g"].reshape(1, E), p["ln2_b"].reshape(1, E),
      p["w1"].astype(jnp.bfloat16), p["b1"].reshape(1, H4),
      p["w2"].astype(jnp.bfloat16), p["b2"].reshape(1, E))
    return out2.reshape(B, S, E)


# ----------------------------- full Block forward ----------------------------
def block_forward(x, params, n_head):
    """x: (B, S, E) f32.  Returns (B, S, E) = x + attn(ln1(x)) + ffn(ln2(.))."""
    x1 = _attention_block(x, params, n_head)
    return _ffn_block(x1, params)


# ----------------------------- params & reference ----------------------------
def init_params(key, n_embed, n_head):
    E = n_embed
    ks = jax.random.split(key, 8)

    def u(k, shape, fan_in):
        lim = 1.0 / math.sqrt(fan_in)          # PyTorch nn.Linear default init
        return jax.random.uniform(k, shape, jnp.float32, minval=-lim, maxval=lim)

    return dict(
        ln1_g=jnp.ones((E,), jnp.float32), ln1_b=jnp.zeros((E,), jnp.float32),
        ln2_g=jnp.ones((E,), jnp.float32), ln2_b=jnp.zeros((E,), jnp.float32),
        # fused QKV: columns [0:E]=Q, [E:2E]=K, [2E:3E]=V; head h at h*D:(h+1)*D
        w_qkv=u(ks[0], (E, 3 * E), E), b_qkv=u(ks[1], (3 * E,), E),
        w_proj=u(ks[2], (E, E), E),    b_proj=u(ks[3], (E,), E),
        w1=u(ks[4], (E, 4 * E), E),    b1=u(ks[5], (4 * E,), E),
        w2=u(ks[6], (4 * E, E), 4 * E), b2=u(ks[7], (E,), 4 * E),
    )


def reference(x, p, n_head):
    """Pure-JAX f32 reference mirroring the PyTorch Block forward."""
    B, S, E = x.shape
    D = E // n_head

    def ln(t, g, b):
        mu = t.mean(-1, keepdims=True)
        var = ((t - mu) ** 2).mean(-1, keepdims=True)
        return (t - mu) / jnp.sqrt(var + LN_EPS) * g + b

    xn = ln(x, p["ln1_g"], p["ln1_b"])
    qkv = xn @ p["w_qkv"] + p["b_qkv"]
    q, k, v = qkv[..., :E], qkv[..., E:2 * E], qkv[..., 2 * E:]
    mask = jnp.tril(jnp.ones((S, S), dtype=bool))
    outs = []
    for h in range(n_head):
        sl = slice(h * D, (h + 1) * D)
        w = jnp.einsum("bqd,bkd->bqk", q[..., sl], k[..., sl])
        w = jnp.where(mask, w, -jnp.inf) / math.sqrt(D)
        w = jax.nn.softmax(w, axis=-1)
        outs.append(w @ v[..., sl])
    att = jnp.concatenate(outs, axis=-1) @ p["w_proj"] + p["b_proj"]
    x1 = x + att

    xn2 = ln(x1, p["ln2_g"], p["ln2_b"])
    h1 = xn2 @ p["w1"] + p["b1"]
    h1 = 0.5 * h1 * (1.0 + jnp.tanh(0.7978845608028654 * (h1 + 0.044715 * h1 ** 3)))
    return x1 + h1 @ p["w2"] + p["b2"]


# ----------------------------------- main ------------------------------------
if __name__ == "__main__":
    # small config consistent with the module: n_embed = n_head * head_size
    B, S = 2, 16                  # block_size = S (causal mask over full seq)
    n_embed, n_head = 32, 4       # head_size = 8

    key = jax.random.PRNGKey(0)
    kx, kp = jax.random.split(key)
    x = jax.random.normal(kx, (B, S, n_embed), jnp.float32)
    params = init_params(kp, n_embed, n_head)

    out = jax.block_until_ready(block_forward(x, params, n_head))

    ref = reference(x, params, n_head)
    assert out.shape == (B, S, n_embed)
    # bf16 MXU operands vs full-f32 reference: allow small numerical slack.
    assert jnp.allclose(out, ref, atol=3e-2, rtol=3e-2), \
        f"mismatch vs reference, max abs diff {float(jnp.max(jnp.abs(out - ref)))}"

    print("KERNEL_OK")
</pallas_src>

<mosaic_0001>
module attributes {stable_mosaic.version = 11 : i64} {
  func.func @_attn_block_kernel(%arg0: i32, %arg1: memref<1x16x32xf32, #tpu.memory_space<vmem>>, %arg2: memref<1x32xf32, #tpu.memory_space<vmem>>, %arg3: memref<1x32xf32, #tpu.memory_space<vmem>>, %arg4: memref<32x96xbf16, #tpu.memory_space<vmem>>, %arg5: memref<1x96xf32, #tpu.memory_space<vmem>>, %arg6: memref<32x32xbf16, #tpu.memory_space<vmem>>, %arg7: memref<1x32xf32, #tpu.memory_space<vmem>>, %arg8: memref<1x16x32xf32, #tpu.memory_space<vmem>>) attributes {dimension_semantics = [#tpu.dimension_semantics<parallel>], iteration_bounds = array<i64: 2>, scalar_prefetch = 0 : i64, scratch_operands = 0 : i64, tpu.core_type = #tpu.core_type<tc>, window_params = [{transform_indices = @transform_0, window_bounds = array<i64: 1, 16, 32>}, {pipeline_mode = #tpu.pipeline_mode<synchronous>, transform_indices = @transform_1, window_bounds = array<i64: 1, 32>}, {pipeline_mode = #tpu.pipeline_mode<synchronous>, transform_indices = @transform_2, window_bounds = array<i64: 1, 32>}, {pipeline_mode = #tpu.pipeline_mode<synchronous>, transform_indices = @transform_3, window_bounds = array<i64: 32, 96>}, {pipeline_mode = #tpu.pipeline_mode<synchronous>, transform_indices = @transform_4, window_bounds = array<i64: 1, 96>}, {pipeline_mode = #tpu.pipeline_mode<synchronous>, transform_indices = @transform_5, window_bounds = array<i64: 32, 32>}, {pipeline_mode = #tpu.pipeline_mode<synchronous>, transform_indices = @transform_6, window_bounds = array<i64: 1, 32>}, {transform_indices = @transform_7, window_bounds = array<i64: 1, 16, 32>}]} {
    %c0 = arith.constant 0 : index
    %c0_0 = arith.constant 0 : index
    %c0_1 = arith.constant 0 : index
    %0 = vector.load %arg1[%c0, %c0_0, %c0_1] : memref<1x16x32xf32, #tpu.memory_space<vmem>>, vector<1x16x32xf32>
    %1 = vector.shape_cast %0 : vector<1x16x32xf32> to vector<16x32xf32>
    %cst = arith.constant dense<0.000000e+00> : vector<16xf32>
    %2 = vector.multi_reduction <add>, %1, %cst [1] : vector<16x32xf32> to vector<16xf32>
    %3 = vector.shape_cast %2 : vector<16xf32> to vector<16x1xf32>
    %cst_2 = arith.constant 3.200000e+01 : f32
    %4 = vector.broadcast %cst_2 : f32 to vector<16x1xf32>
    %5 = arith.divf %3, %4 : vector<16x1xf32>
    %6 = vector.broadcast %5 : vector<16x1xf32> to vector<16x32xf32>
    %7 = arith.subf %1, %6 : vector<16x32xf32>
    %8 = arith.mulf %7, %7 : vector<16x32xf32>
    %cst_3 = arith.constant dense<0.000000e+00> : vector<16xf32>
    %9 = vector.multi_reduction <add>, %8, %cst_3 [1] : vector<16x32xf32> to vector<16xf32>
    %10 = vector.shape_cast %9 : vector<16xf32> to vector<16x1xf32>
    %cst_4 = arith.constant 3.200000e+01 : f32
    %11 = vector.broadcast %cst_4 : f32 to vector<16x1xf32>
    %12 = arith.divf %10, %11 : vector<16x1xf32>
    %13 = vector.broadcast %5 : vector<16x1xf32> to vector<16x32xf32>
    %14 = arith.subf %1, %13 : vector<16x32xf32>
    %cst_5 = arith.constant 9.99999974E-6 : f32
    %15 = vector.broadcast %cst_5 : f32 to vector<16x1xf32>
    %16 = arith.addf %12, %15 : vector<16x1xf32>
    %17 = math.rsqrt %16 : vector<16x1xf32>
    %18 = vector.broadcast %17 : vector<16x1xf32> to vector<16x32xf32>
    %19 = arith.mulf %14, %18 : vector<16x32xf32>
    %c0_6 = arith.constant 0 : index
    %c0_7 = arith.constant 0 : index
    %20 = vector.load %arg2[%c0_6, %c0_7] : memref<1x32xf32, #tpu.memory_space<vmem>>, vector<1x32xf32>
    %21 = vector.broadcast %20 : vector<1x32xf32> to vector<16x32xf32>
    %22 = arith.mulf %19, %21 : vector<16x32xf32>
    %c0_8 = arith.constant 0 : index
    %c0_9 = arith.constant 0 : index
    %23 = vector.load %arg3[%c0_8, %c0_9] : memref<1x32xf32, #tpu.memory_space<vmem>>, vector<1x32xf32>
    %24 = vector.broadcast %23 : vector<1x32xf32> to vector<16x32xf32>
    %25 = arith.addf %22, %24 : vector<16x32xf32>
    %26 = arith.truncf %25 : vector<16x32xf32> to vector<16x32xbf16>
    %c0_10 = arith.constant 0 : index
    %c0_11 = arith.constant 0 : index
    %27 = vector.load %arg4[%c0_10, %c0_11] : memref<32x96xbf16, #tpu.memory_space<vmem>>, vector<32x96xbf16>
    %cst_12 = arith.constant dense<0.000000e+00> : vector<16x96xf32>
    %28 = tpu.matmul %26, %27, %cst_12 {dimension_numbers = #tpu.dot_dimension_numbers<[1], [0], [0], [1], [0, 0, 1, 1], [], []>} : vector<16x32xbf16>, vector<32x96xbf16>, vector<16x96xf32> -> vector<16x96xf32>
    %c0_13 = arith.constant 0 : index
    %c0_14 = arith.constant 0 : index
    %29 = vector.load %arg5[%c0_13, %c0_14] : memref<1x96xf32, #tpu.memory_space<vmem>>, vector<1x96xf32>
    %30 = vector.broadcast %29 : vector<1x96xf32> to vector<16x96xf32>
    %31 = arith.addf %28, %30 : vector<16x96xf32>
    %32 = vector.extract_strided_slice %31 {offsets = [0, 0], sizes = [16, 32], strides = [1, 1]} : vector<16x96xf32> to vector<16x32xf32>
    %cst_15 = arith.constant 0.353553385 : f32
    %33 = vector.broadcast %cst_15 : f32 to vector<16x32xf32>
    %34 = arith.mulf %32, %33 : vector<16x32xf32>
    %35 = vector.extract_strided_slice %31 {offsets = [0, 32], sizes = [16, 32], strides = [1, 1]} : vector<16x96xf32> to vector<16x32xf32>
    %36 = vector.extract_strided_slice %31 {offsets = [0, 64], sizes = [16, 32], strides = [1, 1]} : vector<16x96xf32> to vector<16x32xf32>
    %37 = arith.truncf %34 : vector<16x32xf32> to vector<16x32xbf16>
    %38 = arith.truncf %35 : vector<16x32xf32> to vector<16x32xbf16>
    %39 = arith.truncf %36 : vector<16x32xf32> to vector<16x32xbf16>
    %40 = tpu.iota {dimensions = array<i32: 0>} : vector<16x16xi32>
    %41 = tpu.iota {dimensions = array<i32: 1>} : vector<16x16xi32>
    %42 = arith.cmpi sle, %41, %40 : vector<16x16xi32>
    %43 = vector.extract_strided_slice %37 {offsets = [0, 0], sizes = [16, 8], strides = [1, 1]} : vector<16x32xbf16> to vector<16x8xbf16>
    %44 = vector.extract_strided_slice %38 {offsets = [0, 0], sizes = [16, 8], strides = [1, 1]} : vector<16x32xbf16> to vector<16x8xbf16>
    %cst_16 = arith.constant dense<0.000000e+00> : vector<16x16xf32>
    %45 = tpu.matmul %43, %44, %cst_16 {dimension_numbers = #tpu.dot_dimension_numbers<[1], [1], [0], [0], [0, 0, 1, 0], [], []>} : vector<16x8xbf16>, vector<16x8xbf16>, vector<16x16xf32> -> vector<16x16xf32>
    %cst_17 = arith.constant 0xFF800000 : f32
    %46 = vector.broadcast %cst_17 : f32 to vector<16x16xf32>
    %47 = arith.select %42, %45, %46 : vector<16x16xi1>, vector<16x16xf32>
    %cst_18 = arith.constant dense<0xFF800000> : vector<16xf32>
    %48 = vector.multi_reduction <maximumf>, %47, %cst_18 [1] : vector<16x16xf32> to vector<16xf32>
    %49 = vector.shape_cast %48 : vector<16xf32> to vector<16x1xf32>
    %50 = vector.broadcast %49 : vector<16x1xf32> to vector<16x16xf32>
    %51 = arith.subf %47, %50 : vector<16x16xf32>
    %52 = math.exp %51 : vector<16x16xf32>
    %cst_19 = arith.constant dense<0.000000e+00> : vector<16xf32>
    %53 = vector.multi_reduction <add>, %52, %cst_19 [1] : vector<16x16xf32> to vector<16xf32>
    %54 = vector.shape_cast %53 : vector<16xf32> to vector<16x1xf32>
    %55 = tpu.reciprocal %54 {approx = true} : vector<16x1xf32> -> vector<16x1xf32>
    %56 = vector.broadcast %55 : vector<16x1xf32> to vector<16x16xf32>
    %57 = arith.mulf %52, %56 : vector<16x16xf32>
    %58 = arith.truncf %57 : vector<16x16xf32> to vector<16x16xbf16>
    %59 = vector.extract_strided_slice %39 {offsets = [0, 0], sizes = [16, 8], strides = [1, 1]} : vector<16x32xbf16> to vector<16x8xbf16>
    %cst_20 = arith.constant dense<0.000000e+00> : vector<16x8xf32>
    %60 = tpu.matmul %58, %59, %cst_20 {dimension_numbers = #tpu.dot_dimension_numbers<[1], [0], [0], [1], [0, 0, 1, 1], [], []>} : vector<16x16xbf16>, vector<16x8xbf16>, vector<16x8xf32> -> vector<16x8xf32>
    %61 = vector.extract_strided_slice %37 {offsets = [0, 8], sizes = [16, 8], strides = [1, 1]} : vector<16x32xbf16> to vector<16x8xbf16>
    %62 = vector.extract_strided_slice %38 {offsets = [0, 8], sizes = [16, 8], strides = [1, 1]} : vector<16x32xbf16> to vector<16x8xbf16>
    %cst_21 = arith.constant dense<0.000000e+00> : vector<16x16xf32>
    %63 = tpu.matmul %61, %62, %cst_21 {dimension_numbers = #tpu.dot_dimension_numbers<[1], [1], [0], [0], [0, 0, 1, 0], [], []>} : vector<16x8xbf16>, vector<16x8xbf16>, vector<16x16xf32> -> vector<16x16xf32>
    %cst_22 = arith.constant 0xFF800000 : f32
    %64 = vector.broadcast %cst_22 : f32 to vector<16x16xf32>
    %65 = arith.select %42, %63, %64 : vector<16x16xi1>, vector<16x16xf32>
    %cst_23 = arith.constant dense<0xFF800000> : vector<16xf32>
    %66 = vector.multi_reduction <maximumf>, %65, %cst_23 [1] : vector<16x16xf32> to vector<16xf32>
    %67 = vector.shape_cast %66 : vector<16xf32> to vector<16x1xf32>
    %68 = vector.broadcast %67 : vector<16x1xf32> to vector<16x16xf32>
    %69 = arith.subf %65, %68 : vector<16x16xf32>
    %70 = math.exp %69 : vector<16x16xf32>
    %cst_24 = arith.constant dense<0.000000e+00> : vector<16xf32>
    %71 = vector.multi_reduction <add>, %70, %cst_24 [1] : vector<16x16xf32> to vector<16xf32>
    %72 = vector.shape_cast %71 : vector<16xf32> to vector<16x1xf32>
    %73 = tpu.reciprocal %72 {approx = true} : vector<16x1xf32> -> vector<16x1xf32>
    %74 = vector.broadcast %73 : vector<16x1xf32> to vector<16x16xf32>
    %75 = arith.mulf %70, %74 : vector<16x16xf32>
    %76 = arith.truncf %75 : vector<16x16xf32> to vector<16x16xbf16>
    %77 = vector.extract_strided_slice %39 {offsets = [0, 8], sizes = [16, 8], strides = [1, 1]} : vector<16x32xbf16> to vector<16x8xbf16>
    %cst_25 = arith.constant dense<0.000000e+00> : vector<16x8xf32>
    %78 = tpu.matmul %76, %77, %cst_25 {dimension_numbers = #tpu.dot_dimension_numbers<[1], [0], [0], [1], [0, 0, 1, 1], [], []>} : vector<16x16xbf16>, vector<16x8xbf16>, vector<16x8xf32> -> vector<16x8xf32>
    %79 = vector.extract_strided_slice %37 {offsets = [0, 16], sizes = [16, 8], strides = [1, 1]} : vector<16x32xbf16> to vector<16x8xbf16>
    %80 = vector.extract_strided_slice %38 {offsets = [0, 16], sizes = [16, 8], strides = [1, 1]} : vector<16x32xbf16> to vector<16x8xbf16>
    %cst_26 = arith.constant dense<0.000000e+00> : vector<16x16xf32>
    %81 = tpu.matmul %79, %80, %cst_26 {dimension_numbers = #tpu.dot_dimension_numbers<[1], [1], [0], [0], [0, 0, 1, 0], [], []>} : vector<16x8xbf16>, vector<16x8xbf16>, vector<16x16xf32> -> vector<16x16xf32>
    %cst_27 = arith.constant 0xFF800000 : f32
    %82 = vector.broadcast %cst_27 : f32 to vector<16x16xf32>
    %83 = arith.select %42, %81, %82 : vector<16x16xi1>, vector<16x16xf32>
    %cst_28 = arith.constant dense<0xFF800000> : vector<16xf32>
    %84 = vector.multi_reduction <maximumf>, %83, %cst_28 [1] : vector<16x16xf32> to vector<16xf32>
    %85 = vector.shape_cast %84 : vector<16xf32> to vector<16x1xf32>
    %86 = vector.broadcast %85 : vector<16x1xf32> to vector<16x16xf32>
    %87 = arith.subf %83, %86 : vector<16x16xf32>
    %88 = math.exp %87 : vector<16x16xf32>
    %cst_29 = arith.constant dense<0.000000e+00> : vector<16xf32>
    %89 = vector.multi_reduction <add>, %88, %cst_29 [1] : vector<16x16xf32> to vector<16xf32>
    %90 = vector.shape_cast %89 : vector<16xf32> to vector<16x1xf32>
    %91 = tpu.reciprocal %90 {approx = true} : vector<16x1xf32> -> vector<16x1xf32>
    %92 = vector.broadcast %91 : vector<16x1xf32> to vector<16x16xf32>
    %93 = arith.mulf %88, %92 : vector<16x16xf32>
    %94 = arith.truncf %93 : vector<16x16xf32> to vector<16x16xbf16>
    %95 = vector.extract_strided_slice %39 {offsets = [0, 16], sizes = [16, 8], strides = [1, 1]} : vector<16x32xbf16> to vector<16x8xbf16>
    %cst_30 = arith.constant dense<0.000000e+00> : vector<16x8xf32>
    %96 = tpu.matmul %94, %95, %cst_30 {dimension_numbers = #tpu.dot_dimension_numbers<[1], [0], [0], [1], [0, 0, 1, 1], [], []>} : vector<16x16xbf16>, vector<16x8xbf16>, vector<16x8xf32> -> vector<16x8xf32>
    %97 = vector.extract_strided_slice %37 {offsets = [0, 24], sizes = [16, 8], strides = [1, 1]} : vector<16x32xbf16> to vector<16x8xbf16>
    %98 = vector.extract_strided_slice %38 {offsets = [0, 24], sizes = [16, 8], strides = [1, 1]} : vector<16x32xbf16> to vector<16x8xbf16>
    %cst_31 = arith.constant dense<0.000000e+00> : vector<16x16xf32>
    %99 = tpu.matmul %97, %98, %cst_31 {dimension_numbers = #tpu.dot_dimension_numbers<[1], [1], [0], [0], [0, 0, 1, 0], [], []>} : vector<16x8xbf16>, vector<16x8xbf16>, vector<16x16xf32> -> vector<16x16xf32>
    %cst_32 = arith.constant 0xFF800000 : f32
    %100 = vector.broadcast %cst_32 : f32 to vector<16x16xf32>
    %101 = arith.select %42, %99, %100 : vector<16x16xi1>, vector<16x16xf32>
    %cst_33 = arith.constant dense<0xFF800000> : vector<16xf32>
    %102 = vector.multi_reduction <maximumf>, %101, %cst_33 [1] : vector<16x16xf32> to vector<16xf32>
    %103 = vector.shape_cast %102 : vector<16xf32> to vector<16x1xf32>
    %104 = vector.broadcast %103 : vector<16x1xf32> to vector<16x16xf32>
    %105 = arith.subf %101, %104 : vector<16x16xf32>
    %106 = math.exp %105 : vector<16x16xf32>
    %cst_34 = arith.constant dense<0.000000e+00> : vector<16xf32>
    %107 = vector.multi_reduction <add>, %106, %cst_34 [1] : vector<16x16xf32> to vector<16xf32>
    %108 = vector.shape_cast %107 : vector<16xf32> to vector<16x1xf32>
    %109 = tpu.reciprocal %108 {approx = true} : vector<16x1xf32> -> vector<16x1xf32>
    %110 = vector.broadcast %109 : vector<16x1xf32> to vector<16x16xf32>
    %111 = arith.mulf %106, %110 : vector<16x16xf32>
    %112 = arith.truncf %111 : vector<16x16xf32> to vector<16x16xbf16>
    %113 = vector.extract_strided_slice %39 {offsets = [0, 24], sizes = [16, 8], strides = [1, 1]} : vector<16x32xbf16> to vector<16x8xbf16>
    %cst_35 = arith.constant dense<0.000000e+00> : vector<16x8xf32>
    %114 = tpu.matmul %112, %113, %cst_35 {dimension_numbers = #tpu.dot_dimension_numbers<[1], [0], [0], [1], [0, 0, 1, 1], [], []>} : vector<16x16xbf16>, vector<16x8xbf16>, vector<16x8xf32> -> vector<16x8xf32>
    %115 = tpu.concatenate %60, %78, %96, %114 in 1 : vector<16x8xf32>, vector<16x8xf32>, vector<16x8xf32>, vector<16x8xf32> -> vector<16x32xf32>
    %116 = arith.truncf %115 : vector<16x32xf32> to vector<16x32xbf16>
    %c0_36 = arith.constant 0 : index
    %c0_37 = arith.constant 0 : index
    %117 = vector.load %arg6[%c0_36, %c0_37] : memref<32x32xbf16, #tpu.memory_space<vmem>>, vector<32x32xbf16>
    %cst_38 = arith.constant dense<0.000000e+00> : vector<16x32xf32>
    %118 = tpu.matmul %116, %117, %cst_38 {dimension_numbers = #tpu.dot_dimension_numbers<[1], [0], [0], [1], [0, 0, 1, 1], [], []>} : vector<16x32xbf16>, vector<32x32xbf16>, vector<16x32xf32> -> vector<16x32xf32>
    %c0_39 = arith.constant 0 : index
    %c0_40 = arith.constant 0 : index
    %119 = vector.load %arg7[%c0_39, %c0_40] : memref<1x32xf32, #tpu.memory_space<vmem>>, vector<1x32xf32>
    %120 = vector.broadcast %119 : vector<1x32xf32> to vector<16x32xf32>
    %121 = arith.addf %118, %120 : vector<16x32xf32>
    %122 = arith.addf %1, %121 : vector<16x32xf32>
    %c0_41 = arith.constant 0 : index
    %c0_42 = arith.constant 0 : index
    %c0_43 = arith.constant 0 : index
    %123 = vector.load %arg8[%c0_41, %c0_42, %c0_43] : memref<1x16x32xf32, #tpu.memory_space<vmem>>, vector<1x16x32xf32>
    %124 = vector.shape_cast %123 : vector<1x16x32xf32> to vector<16x32xf32>
    %125 = vector.shape_cast %122 : vector<16x32xf32> to vector<1x16x32xf32>
    tpu.vector_store %arg8[%c0_41, %c0_42, %c0_43], %125 {strides = array<i32>} : memref<1x16x32xf32, #tpu.memory_space<vmem>>, vector<1x16x32xf32>,
    return
  }
  func.func @transform_0(%arg0: i32) -> (i32, i32, i32) {
    %c0_i32 = arith.constant 0 : i32
    %c0_i32_0 = arith.constant 0 : i32
    %c0_i32_1 = arith.constant 0 : i32
    return %arg0, %c0_i32, %c0_i32_0 : i32, i32, i32
  }
  func.func @transform_1(%arg0: i32) -> (i32, i32) {
    %c0_i32 = arith.constant 0 : i32
    %c0_i32_0 = arith.constant 0 : i32
    %c0_i32_1 = arith.constant 0 : i32
    return %c0_i32, %c0_i32_0 : i32, i32
  }
  func.func @transform_2(%arg0: i32) -> (i32, i32) {
    %c0_i32 = arith.constant 0 : i32
    %c0_i32_0 = arith.constant 0 : i32
    %c0_i32_1 = arith.constant 0 : i32
    return %c0_i32, %c0_i32_0 : i32, i32
  }
  func.func @transform_3(%arg0: i32) -> (i32, i32) {
    %c0_i32 = arith.constant 0 : i32
    %c0_i32_0 = arith.constant 0 : i32
    %c0_i32_1 = arith.constant 0 : i32
    return %c0_i32, %c0_i32_0 : i32, i32
  }
  func.func @transform_4(%arg0: i32) -> (i32, i32) {
    %c0_i32 = arith.constant 0 : i32
    %c0_i32_0 = arith.constant 0 : i32
    %c0_i32_1 = arith.constant 0 : i32
    return %c0_i32, %c0_i32_0 : i32, i32
  }
  func.func @transform_5(%arg0: i32) -> (i32, i32) {
    %c0_i32 = arith.constant 0 : i32
    %c0_i32_0 = arith.constant 0 : i32
    %c0_i32_1 = arith.constant 0 : i32
    return %c0_i32, %c0_i32_0 : i32, i32
  }
  func.func @transform_6(%arg0: i32) -> (i32, i32) {
    %c0_i32 = arith.constant 0 : i32
    %c0_i32_0 = arith.constant 0 : i32
    %c0_i32_1 = arith.constant 0 : i32
    return %c0_i32, %c0_i32_0 : i32, i32
  }
  func.func @transform_7(%arg0: i32) -> (i32, i32, i32) {
    %c0_i32 = arith.constant 0 : i32
    %c0_i32_0 = arith.constant 0 : i32
    %c0_i32_1 = arith.constant 0 : i32
    return %arg0, %c0_i32, %c0_i32_0 : i32, i32, i32
  }
}

</mosaic_0001>

<llo_original>
// kernel: tpu_custom_call.1
$region0: #{tpu_custom_call.1}
  #allocation0 [shape = 'u32[]', space=smem, size = 0x4, offset = 0x4, fixed_abs, tag = 'smem constant byte address 0x4 - core index']
  #allocation1 [shape = 'u32[72,128]{1,0:T(1,128)}', space=vmem, size = 0x9000, scoped, tag = 'internal scratch']
  %s0 = inlined_call_operand.hbm [shape: f32[2,16,32], index: 0, kind: input, shape index: {}]
  %s1 = inlined_call_operand.hbm [shape: f32[1,32], index: 1, kind: input, shape index: {}]
  %s2 = inlined_call_operand.vmem [shape: f32[1,32], index: 2, kind: input, shape index: {}]
  %s3 = inlined_call_operand.hbm [shape: bf16[32,96], index: 3, kind: input, shape index: {}]
  %s4 = inlined_call_operand.vmem [shape: f32[1,96], index: 4, kind: input, shape index: {}]
  %s5 = inlined_call_operand.hbm [shape: bf16[32,32], index: 5, kind: input, shape index: {}]
  %s6 = inlined_call_operand.vmem [shape: f32[1,32], index: 6, kind: input, shape index: {}]
  %s7 = inlined_call_operand.hbm [shape: f32[2,16,32], index: 7, kind: output, shape index: {}]
  %s8 = sld [smem:[#allocation0]]
  $region77: #{tpu_custom_call.1} parent=0
    _
  %s10 = ssub.s32 1, %s8
  %s11 = scalar_select 0, %s10, %s8
  $region1: #{tpu_custom_call.1} parent=0
    #allocation2 [shape = 'u8[16384]{0}', space=vmem, size = 0x4000, scoped, tag = 'input window, operand 0']
    #allocation3 [shape = 's32[2]{0}', space=sflag, size = 0x8, scoped, tag = 'scoped memory for tpu_custom_call.1']
    #allocation4 [shape = 's32[2]{0}', space=sflag, size = 0x8, scoped, tag = 'scoped memory for tpu_custom_call.1']
    #allocation5 [shape = 'u8[512]{0}', space=vmem, size = 0x400, scoped, tag = 'input window, operand 1, single buffered']
    #allocation6 [shape = 's32[1]{0}', space=sflag, size = 0x4, scoped, tag = 'scoped memory for tpu_custom_call.1']
    #allocation7 [shape = 'u8[8192]{0}', space=vmem, size = 0x2000, scoped, tag = 'input window, operand 3, single buffered']
    #allocation8 [shape = 'u8[8192]{0}', space=vmem, size = 0x2000, scoped, tag = 'input window, operand 5, single buffered']
    #allocation9 [shape = 's32[1]{0}', space=sflag, size = 0x4, scoped, tag = 'scoped memory for tpu_custom_call.1']
    #allocation10 [shape = 'u8[16384]{0}', space=vmem, size = 0x4000, scoped, tag = 'output window, operand 0']
    %12 = vsyncpa [#allocation3], 0
    %s13 = scalar_lea.sflag [#allocation3], 1
    %14 = vsyncpa %s13, 0
    %15 = vsyncpa [#allocation6], 0
    %16 = vsyncpa [#allocation9], 0
    %17 = vsyncpa [#allocation4], 0
    %s18 = scalar_lea.sflag [#allocation4], 1
    %19 = vsyncpa %s18, 0
    loop: start=0, step=1, limit=4
    $region2: #{tpu_custom_call.1} parent=1 // loop_pre_header
      _
    $region3: #{tpu_custom_call.1} parent=1 // loop_header
      %s21 = sphi 0, %s25
      %p22 = scmp.ge.s32.totalorder %s21, 4
      %s31 = sphi 0, %s33
      %s34 = sphi 0, %s31
      %s35 = sphi 0, %s34
      %s51 = sphi 0, %s35
      %s55 = sphi 0, %s55
      %s57 = sphi 0, %s55
      %s58 = sphi 0, %s57
      %s72 = sphi 0, %s58
      %s76 = sphi 0, %s76
      %s78 = sphi 0, %s76
      %s79 = sphi 0, %s78
      %s93 = sphi 0, %s79
      %s97 = sphi 0, %s97
      %s99 = sphi 0, %s97
      %s100 = sphi 0, %s99
      %s114 = sphi 0, %s100
      %s118 = sphi 0, %s118
      %s120 = sphi 0, %s118
      %s121 = sphi 0, %s120
      %s135 = sphi 0, %s121
      %s139 = sphi 0, %s139
      %s141 = sphi 0, %s139
      %s142 = sphi 0, %s141
      %s156 = sphi 0, %s142
      %s160 = sphi 0, %s160
      %s162 = sphi 0, %s160
      %s163 = sphi 0, %s162
      %s177 = sphi 0, %s163
      %s183 = sphi 0, %s185
      %s186 = sphi 0, %s183
      %s187 = sphi 0, %s186
      %s203 = sphi 0, %s187
    $region4: #{tpu_custom_call.1} parent=1 // loop_header_branch
      %24 = sbr.rel (%p22) target = $region8
    $region5: #{tpu_custom_call.1} parent=1 // loop_body
      %s26 = ssub.s32 %s21, 1
      %s27 = ssub.s32 %s21, 2
      %s28 = sadd.s32 %s21, 1
      %s29 = ssub.s32 %s21, %s28
      %p30 = scmp.eq.s32.totalorder %s29, 0
      %s32 = sadd.s32 %s31, 1
      %s33 = scalar_select %p30, %s31, %s32
      %p36 = pneg %p30
      %p37 = scmp.eq.s32.totalorder %s21, 1
      %p38 = por %p36, %p37
      %p39 = scmp.ne.s32.totalorder %s31, %s34
      %p40 = scmp.eq.s32.totalorder %s21, 0
      %p41 = por %p39, %p40
      %p42 = scmp.ne.s32.totalorder %s31, %s34
      %p43 = scmp.eq.s32.totalorder %s26, 1
      %p44 = por %p42, %p43
      %p45 = scmp.ne.s32.totalorder %s34, %s35
      %p46 = scmp.eq.s32.totalorder %s26, 0
      %p47 = por %p45, %p46
      %p48 = scmp.ne.s32.totalorder %s34, %s35
      %p49 = scmp.eq.s32.totalorder %s27, 1
      %p50 = por %p48, %p49
      %p52 = scmp.ne.s32.totalorder %s35, %s51
      %p53 = scmp.eq.s32.totalorder %s27, 0
      %p54 = por %p52, %p53
      %s56 = sadd.s32 %s55, 1
      %p59 = scmp.eq.s32.totalorder %s21, 1
      %p60 = scmp.ne.s32.totalorder %s55, %s57
      %p61 = scmp.eq.s32.totalorder %s21, 0
      %p62 = por %p60, %p61
      %p63 = scmp.ne.s32.totalorder %s55, %s57
      %p64 = scmp.eq.s32.totalorder %s26, 1
      %p65 = por %p63, %p64
      %p66 = scmp.ne.s32.totalorder %s57, %s58
      %p67 = scmp.eq.s32.totalorder %s26, 0
      %p68 = por %p66, %p67
      %p69 = scmp.ne.s32.totalorder %s57, %s58
      %p70 = scmp.eq.s32.totalorder %s27, 1
      %p71 = por %p69, %p70
      %p73 = scmp.ne.s32.totalorder %s58, %s72
      %p74 = scmp.eq.s32.totalorder %s27, 0
      %p75 = por %p73, %p74
      %s77 = sadd.s32 %s76, 1
      %p80 = scmp.eq.s32.totalorder %s21, 1
      %p81 = scmp.ne.s32.totalorder %s76, %s78
      %p82 = scmp.eq.s32.totalorder %s21, 0
      %p83 = por %p81, %p82
      %p84 = scmp.ne.s32.totalorder %s76, %s78
      %p85 = scmp.eq.s32.totalorder %s26, 1
      %p86 = por %p84, %p85
      %p87 = scmp.ne.s32.totalorder %s78, %s79
      %p88 = scmp.eq.s32.totalorder %s26, 0
      %p89 = por %p87, %p88
      %p90 = scmp.ne.s32.totalorder %s78, %s79
      %p91 = scmp.eq.s32.totalorder %s27, 1
      %p92 = por %p90, %p91
      %p94 = scmp.ne.s32.totalorder %s79, %s93
      %p95 = scmp.eq.s32.totalorder %s27, 0
      %p96 = por %p94, %p95
      %s98 = sadd.s32 %s97, 1
      %p101 = scmp.eq.s32.totalorder %s21, 1
      %p102 = scmp.ne.s32.totalorder %s97, %s99
      %p103 = scmp.eq.s32.totalorder %s21, 0
      %p104 = por %p102, %p103
      %p105 = scmp.ne.s32.totalorder %s97, %s99
      %p106 = scmp.eq.s32.totalorder %s26, 1
      %p107 = por %p105, %p106
      %p108 = scmp.ne.s32.totalorder %s99, %s100
      %p109 = scmp.eq.s32.totalorder %s26, 0
      %p110 = por %p108, %p109
      %p111 = scmp.ne.s32.totalorder %s99, %s100
      %p112 = scmp.eq.s32.totalorder %s27, 1
      %p113 = por %p111, %p112
      %p115 = scmp.ne.s32.totalorder %s100, %s114
      %p116 = scmp.eq.s32.totalorder %s27, 0
      %p117 = por %p115, %p116
      %s119 = sadd.s32 %s118, 1
      %p122 = scmp.eq.s32.totalorder %s21, 1
      %p123 = scmp.ne.s32.totalorder %s118, %s120
      %p124 = scmp.eq.s32.totalorder %s21, 0
      %p125 = por %p123, %p124
      %p126 = scmp.ne.s32.totalorder %s118, %s120
      %p127 = scmp.eq.s32.totalorder %s26, 1
      %p128 = por %p126, %p127
      %p129 = scmp.ne.s32.totalorder %s120, %s121
      %p130 = scmp.eq.s32.totalorder %s26, 0
      %p131 = por %p129, %p130
      %p132 = scmp.ne.s32.totalorder %s120, %s121
      %p133 = scmp.eq.s32.totalorder %s27, 1
      %p134 = por %p132, %p133
      %p136 = scmp.ne.s32.totalorder %s121, %s135
      %p137 = scmp.eq.s32.totalorder %s27, 0
      %p138 = por %p136, %p137
      %s140 = sadd.s32 %s139, 1
      %p143 = scmp.eq.s32.totalorder %s21, 1
      %p144 = scmp.ne.s32.totalorder %s139, %s141
      %p145 = scmp.eq.s32.totalorder %s21, 0
      %p146 = por %p144, %p145
      %p147 = scmp.ne.s32.totalorder %s139, %s141
      %p148 = scmp.eq.s32.totalorder %s26, 1
      %p149 = por %p147, %p148
      %p150 = scmp.ne.s32.totalorder %s141, %s142
      %p151 = scmp.eq.s32.totalorder %s26, 0
      %p152 = por %p150, %p151
      %p153 = scmp.ne.s32.totalorder %s141, %s142
      %p154 = scmp.eq.s32.totalorder %s27, 1
      %p155 = por %p153, %p154
      %p157 = scmp.ne.s32.totalorder %s142, %s156
      %p158 = scmp.eq.s32.totalorder %s27, 0
      %p159 = por %p157, %p158
      %s161 = sadd.s32 %s160, 1
      %p164 = scmp.eq.s32.totalorder %s21, 1
      %p165 = scmp.ne.s32.totalorder %s160, %s162
      %p166 = scmp.eq.s32.totalorder %s21, 0
      %p167 = por %p165, %p166
      %p168 = scmp.ne.s32.totalorder %s160, %s162
      %p169 = scmp.eq.s32.totalorder %s26, 1
      %p170 = por %p168, %p169
      %p171 = scmp.ne.s32.totalorder %s162, %s163
      %p172 = scmp.eq.s32.totalorder %s26, 0
      %p173 = por %p171, %p172
      %p174 = scmp.ne.s32.totalorder %s162, %s163
      %p175 = scmp.eq.s32.totalorder %s27, 1
      %p176 = por %p174, %p175
      %p178 = scmp.ne.s32.totalorder %s163, %s177
      %p179 = scmp.eq.s32.totalorder %s27, 0
      %p180 = por %p178, %p179
      %s181 = ssub.s32 %s21, %s28
      %p182 = scmp.eq.s32.totalorder %s181, 0
      %s184 = sadd.s32 %s183, 1
      %s185 = scalar_select %p182, %s183, %s184
      %p188 = pneg %p182
      %p189 = scmp.eq.s32.totalorder %s21, 1
      %p190 = por %p188, %p189
      %p191 = scmp.ne.s32.totalorder %s183, %s186
      %p192 = scmp.eq.s32.totalorder %s21, 0
      %p193 = por %p191, %p192
      %p194 = scmp.ne.s32.totalorder %s183, %s186
      %p195 = scmp.eq.s32.totalorder %s26, 1
      %p196 = por %p194, %p195
      %p197 = scmp.ne.s32.totalorder %s186, %s187
      %p198 = scmp.eq.s32.totalorder %s26, 0
      %p199 = por %p197, %p198
      %p200 = scmp.ne.s32.totalorder %s186, %s187
      %p201 = scmp.eq.s32.totalorder %s27, 1
      %p202 = por %p200, %p201
      %p204 = scmp.ne.s32.totalorder %s187, %s203
      %p205 = scmp.eq.s32.totalorder %s27, 0
      %p206 = por %p204, %p205
      %p207 = scmp.le.s32.totalorder 1, %s21
      %p208 = scmp.lt.s32.totalorder %s21, 3
      %p209 = pnand %p207, %p208
      %p210 = pneg %p209
      // Predicated region
      $region9: #{tpu_custom_call.1} parent=5 // pred_check
        _
      $region10: #{tpu_custom_call.1} parent=5 // pred_check_branch
        %212 = sbr.rel (%p209) target = $region12
      $region11: #{tpu_custom_call.1} parent=5 // pred_region
        %s213 = ssub.s32 %s21, 1
        // Predicated region
        $region13: #{tpu_custom_call.1} parent=11 // pred_check
          %p214 = pneg %p68
        $region14: #{tpu_custom_call.1} parent=11 // pred_check_branch
          %216 = sbr.rel (%p214) target = $region16
        $region15: #{tpu_custom_call.1} parent=11 // pred_region
          %218 = vsyncadd [#allocation6], 0
          %s220 = sshll.u32 %s1, 4
          %s221 = int_to_ptr.hbm [resolvable:$true] %s220
          %s222 = sshll.u32 [#allocation5], 4
          %s223 = int_to_ptr.vmem [resolvable:$true] %s222
          %225 = dma.hbm_to_vmem [thread:$0]  %s221, 16, %s223, [#allocation6]
        $region16: #{tpu_custom_call.1} parent=11 // pred_fallthru
          _
        // Predicated region
        $region17: #{tpu_custom_call.1} parent=11 // pred_check
          %p226 = pneg %p89
        $region18: #{tpu_custom_call.1} parent=11 // pred_check_branch
          %228 = sbr.rel (%p226) target = $region20
        $region19: #{tpu_custom_call.1} parent=11 // pred_region
          _
        $region20: #{tpu_custom_call.1} parent=11 // pred_fallthru
          _
        // Predicated region
        $region21: #{tpu_custom_call.1} parent=11 // pred_check
          %p229 = pneg %p110
        $region22: #{tpu_custom_call.1} parent=11 // pred_check_branch
          %231 = sbr.rel (%p229) target = $region24
        $region23: #{tpu_custom_call.1} parent=11 // pred_region
          %233 = vsyncadd [#allocation6], 0
          %s234 = sshll.u32 %s3, 4
          %s235 = int_to_ptr.hbm [resolvable:$true] %s234
          %s236 = sshll.u32 [#allocation7], 4
          %s237 = int_to_ptr.vmem [resolvable:$true] %s236
          %242 = dma.hbm_to_vmem [thread:$0]  %s235, 256, %s237, [#allocation6], 64, 64, 4
        $region24: #{tpu_custom_call.1} parent=11 // pred_fallthru
          _
        // Predicated region
        $region25: #{tpu_custom_call.1} parent=11 // pred_check
          %p243 = pneg %p131
        $region26: #{tpu_custom_call.1} parent=11 // pred_check_branch
          %245 = sbr.rel (%p243) target = $region28
        $region27: #{tpu_custom_call.1} parent=11 // pred_region
          _
        $region28: #{tpu_custom_call.1} parent=11 // pred_fallthru
          _
        // Predicated region
        $region29: #{tpu_custom_call.1} parent=11 // pred_check
          %p246 = pneg %p152
        $region30: #{tpu_custom_call.1} parent=11 // pred_check_branch
          %248 = sbr.rel (%p246) target = $region32
        $region31: #{tpu_custom_call.1} parent=11 // pred_region
          %250 = vsyncadd [#allocation9], 0
          %s251 = sshll.u32 %s5, 4
          %s252 = int_to_ptr.hbm [resolvable:$true] %s251
          %s253 = sshll.u32 [#allocation8], 4
          %s254 = int_to_ptr.vmem [resolvable:$true] %s253
          %259 = dma.hbm_to_vmem [thread:$0]  %s252, 256, %s254, [#allocation9], 64, 64, 4
        $region32: #{tpu_custom_call.1} parent=11 // pred_fallthru
          _
        // Predicated region
        $region33: #{tpu_custom_call.1} parent=11 // pred_check
          %p260 = pneg %p173
        $region34: #{tpu_custom_call.1} parent=11 // pred_check_branch
          %262 = sbr.rel (%p260) target = $region36
        $region35: #{tpu_custom_call.1} parent=11 // pred_region
          _
        $region36: #{tpu_custom_call.1} parent=11 // pred_fallthru
          _
      $region12: #{tpu_custom_call.1} parent=5 // pred_fallthru
        _
      %p263 = scmp.lt.s32.totalorder %s21, 2
      // Predicated region
      $region37: #{tpu_custom_call.1} parent=5 // pred_check
        %p264 = pneg %p263
      $region38: #{tpu_custom_call.1} parent=5 // pred_check_branch
        %266 = sbr.rel (%p264) target = $region40
      $region39: #{tpu_custom_call.1} parent=5 // pred_region
        // Predicated region
        $region41: #{tpu_custom_call.1} parent=39 // pred_check
          %p267 = pneg %p41
        $region42: #{tpu_custom_call.1} parent=39 // pred_check_branch
          %269 = sbr.rel (%p267) target = $region44
        $region43: #{tpu_custom_call.1} parent=39 // pred_region
          %s270 = sand.u32 %s31, 1
          %s271 = scalar_lea.sflag [#allocation3], %s270
          %s272 = sand.u32 %s31, 1
          %s273 = smul.addr %s272, 16
          %s274 = scalar_lea.vmem [#allocation2], %s273
          %276 = vsyncadd %s271, 0
          %s277 = smul.addr %s21, 2
          %s278 = smul.addr %s277, 8
          %s279 = scalar_lea.hbm %s0, %s278
          %s280 = sshll.u32 %s279, 4
          %s281 = int_to_ptr.hbm [resolvable:$true] %s280
          %s282 = sshll.u32 %s274, 4
          %s283 = int_to_ptr.vmem [resolvable:$true] %s282
          %288 = dma.hbm_to_vmem [thread:$0]  %s281, 256, %s283, %s271, 128, 128, 8
        $region44: #{tpu_custom_call.1} parent=39 // pred_fallthru
          _
      $region40: #{tpu_custom_call.1} parent=5 // pred_fallthru
        _
      %p289 = scmp.le.s32.totalorder 1, %s21
      %p290 = scmp.lt.s32.totalorder %s21, 3
      %p291 = pnand %p289, %p290
      %p292 = pneg %p291
      // Predicated region
      $region45: #{tpu_custom_call.1} parent=5 // pred_check
        _
      $region46: #{tpu_custom_call.1} parent=5 // pred_check_branch
        %294 = sbr.rel (%p291) target = $region48
      $region47: #{tpu_custom_call.1} parent=5 // pred_region
        %s295 = ssub.s32 %s21, 1
        %s296 = sand.u32 %s34, 1
        %s297 = scalar_lea.sflag [#allocation3], %s296
        %s298 = sand.u32 %s34, 1
        %s299 = smul.addr %s298, 16
        %s300 = scalar_lea.vmem [#allocation2], %s299
        // Predicated region
        $region49: #{tpu_custom_call.1} parent=47 // pred_check
          %p301 = pneg %p47
        $region50: #{tpu_custom_call.1} parent=47 // pred_check_branch
          %303 = sbr.rel (%p301) target = $region52
        $region51: #{tpu_custom_call.1} parent=47 // pred_region
          %305 = dma.done %s297, 256
        $region52: #{tpu_custom_call.1} parent=47 // pred_fallthru
          _
        // Predicated region
        $region53: #{tpu_custom_call.1} parent=47 // pred_check
          %p306 = pneg %p68
        $region54: #{tpu_custom_call.1} parent=47 // pred_check_branch
          %308 = sbr.rel (%p306) target = $region56
        $region55: #{tpu_custom_call.1} parent=47 // pred_region
          %310 = dma.done [#allocation6], 16
        $region56: #{tpu_custom_call.1} parent=47 // pred_fallthru
          _
        // Predicated region
        $region57: #{tpu_custom_call.1} parent=47 // pred_check
          %p311 = pneg %p110
        $region58: #{tpu_custom_call.1} parent=47 // pred_check_branch
          %313 = sbr.rel (%p311) target = $region60
        $region59: #{tpu_custom_call.1} parent=47 // pred_region
          %315 = dma.done [#allocation6], 256
        $region60: #{tpu_custom_call.1} parent=47 // pred_fallthru
          _
        // Predicated region
        $region61: #{tpu_custom_call.1} parent=47 // pred_check
          %p316 = pneg %p152
        $region62: #{tpu_custom_call.1} parent=47 // pred_check_branch
          %318 = sbr.rel (%p316) target = $region64
        $region63: #{tpu_custom_call.1} parent=47 // pred_region
          %320 = dma.done [#allocation9], 256
        $region64: #{tpu_custom_call.1} parent=47 // pred_fallthru
          _
        %s321 = sand.u32 %s34, 1
        %s322 = scalar_lea.sflag [#allocation3], %s321
        %s323 = sand.u32 %s34, 1
        %s324 = smul.addr %s323, 16
        %s325 = scalar_lea.vmem [#allocation2], %s324
        %p326 = pneg %p47
        %p327 = pneg %p44
        %p328 = pneg %p68
        %p329 = pneg %p65
        %p330 = pneg %p89
        %p331 = pneg %p86
        %p332 = pneg %p110
        %p333 = pneg %p107
        %p334 = pneg %p131
        %p335 = pneg %p128
        %p336 = pneg %p152
        %p337 = pneg %p149
        %p338 = pneg %p173
        %p339 = pneg %p170
        %p340 = pneg %p199
        %p341 = pneg %p196
        %s342 = sand.u32 %s186, 1
        %s343 = scalar_lea.sflag [#allocation4], %s342
        %s344 = sand.u32 %s186, 1
        %s345 = smul.addr %s344, 16
        %s346 = scalar_lea.vmem [#allocation10], %s345
        %v348 = vld [vmem:[%s300] sm:$0xff]
        %v349 = vld [vmem:[%s300 + $0x8] sm:$0xff]
        %vm350 = vcmask 261120
        %v351 = vsel %vm350, %v348, 0.0
        %352 = vadd.xlane.f32.xlu0 %v351
        %v353 = vpop.xlane.xlu0 %352
        %v354 = vsel %vm350, %v349, 0.0
        %355 = vadd.xlane.f32.xlu0 %v354
        %v356 = vpop.xlane.xlu0 %355
        %v357 = vrcp.pop 32.0
        %v358 = vmul.f32 32.0, %v357
        %v359 = vsub.f32 1.0, %v358
        %v360 = vmul.f32 %v357, %v359
        %v361 = vadd.f32 %v357, %v360
        %vm362 = vweird.f32 %v357
        %v363 = vsel %vm362, %v357, %v361
        %v364 = vmul.f32 %v353, %v363
        %v365 = vmul.f32 %v356, %v363
        %v366 = vsub.f32 %v348, %v364
        %v367 = vsub.f32 %v349, %v365
        %v368 = vmul.f32 %v366, %v366
        %v369 = vmul.f32 %v367, %v367
        %v370 = vsel %vm350, %v368, 0.0
        %371 = vadd.xlane.f32.xlu0 %v370
        %v372 = vpop.xlane.xlu0 %371
        %v373 = vsel %vm350, %v369, 0.0
        %374 = vadd.xlane.f32.xlu0 %v373
        %v375 = vpop.xlane.xlu0 %374
        %v376 = vmul.f32 %v372, %v363
        %v377 = vmul.f32 %v375, %v363
        %v378 = vadd.f32 %v376, 1e-05
        %v379 = vadd.f32 %v377, 1e-05
        %v380 = vrsqrt.pop %v378
        %v381 = vmul.f32 %v380, %v378
        %v382 = vmul.f32 %v381, %v380
        %v383 = vmul.f32 0.5, %v382
        %v384 = vsub.f32 1.5, %v383
        %v385 = vmul.f32 %v380, %v384
        %vm386 = vweird.f32 %v378
        %vm387 = vweird.f32 %v380
        %vm388 = vmor %vm386, %vm387
        %v389 = vsel %vm388, %v380, %v385
        %v390 = vrsqrt.pop %v379
        %v391 = vmul.f32 %v390, %v379
        %v392 = vmul.f32 %v391, %v390
        %v393 = vmul.f32 0.5, %v392
        %v394 = vsub.f32 1.5, %v393
        %v395 = vmul.f32 %v390, %v394
        %vm396 = vweird.f32 %v379
        %vm397 = vweird.f32 %v390
        %vm398 = vmor %vm396, %vm397
        %v399 = vsel %vm398, %v390, %v395
        %v400 = vmul.f32 %v366, %v389
        %v401 = vmul.f32 %v367, %v399
        %v402 = vld [vmem:[#allocation5] sm:$0x1]
        %v404 = vperm.slane %v402, 0
        %v406 = vmul.f32 %v400, %v404
        %v407 = vmul.f32 %v401, %v404
        %v408 = vld [vmem:[%s2] sm:$0x1]
        %v410 = vperm.slane %v408, 0
        %v412 = vadd.f32 %v406, %v410
        %v413 = vadd.f32 %v407, %v410
        %v414 = vpack.c.bf16 %v413, %v412
        %v415 = vld [vmem:[#allocation7] sm:$0xf]
        %v416 = vld [vmem:[#allocation7 + $0x4] sm:$0xf]
        %v417 = vld [vmem:[#allocation7 + $0x8] sm:$0xf]
        %v418 = vld [vmem:[#allocation7 + $0xc] sm:$0xf]
        %v419 = vld [vmem:[%s4] sm:$0x1]
        %v421 = vperm.slane %v419, 0
        %v427 = vunpack.c.l.b16 %v415
        %v428 = vunpack.c.l.b16 %v416
        %v429 = vunpack.c.l.b16 %v417
        %v430 = vunpack.c.l.b16 %v418
        %v431 = vpack.c.b16 %v428, %v427
        %v432 = vpack.c.b16 %v430, %v429
        %v436 = vsel %vm350, %v414, 0
        %438 = vmatpush.bf16.msra.mxu0 0
        %439 = vmatpush.bf16.msra.mxu0 0
        %440 = vmatpush.bf16.msra.mxu0 0
        %441 = vmatpush.bf16.msra.mxu0 0
        %442 = vmatpush.bf16.msra.mxu0 0
        %443 = vmatpush.bf16.msra.mxu0 0
        %444 = vmatpush.bf16.msra.mxu0 %v432
        %445 = vmatpush.bf16.msra.mxu0 %v431
        %446 = vmatmul.bf16.gmra.mxu0 %v436
        %v447 = vpop.f32.mrf.mxu0
        %v448 = vadd.f32 %v421, %v447
        %v449 = vpop.f32.mrf.mxu0
        %v450 = vadd.f32 %v421, %v449
        %451 = vdwg.mxu0
        %v452 = vmul.f32 %v448, 0.35355338
        %v453 = vmul.f32 %v450, 0.35355338
        %v454 = vpack.c.bf16 %v452, %v452
        %v455 = vpack.c.bf16 %v453, %v453
        %v456 = vpack.c.bf16 %v448, %v448
        %v457 = vpack.c.bf16 %v450, %v450
        %v458 = vlaneseq
        %v459 = vshrl.u32 %v458, 7
        %v460 = vadd.s32 %v459, 8
        %v461 = vlaneseq
        %v462 = vand.u32 %v461, 127
        %vm463 = vcmp.le.s32.totalorder %v462, %v459
        %vm464 = vcmp.le.s32.totalorder %v462, %v460
        %v467 = vunpack.c.l.b16 %v454
        %v468 = vunpack.c.l.b16 %v455
        %v469 = vpack.c.b16 %v468, %v467
        %v472 = vunpack.c.l.b16 %v456
        %v473 = vunpack.c.l.b16 %v457
        %v474 = vpack.c.b16 %v473, %v472
        %475 = vrot.lane.b32.xlu0 %v474, 96
        %v476 = vpop.permute.xlu0 %475
        %vm477 = vcmask 64512
        %v479 = vsel %vm477, %v469, 0
        %v482 = vsel %vm477, %v476, 0
        %484 = vmatpush.bf16.xpose.msra.mxu0 0
        %485 = vmatpush.bf16.xpose.msra.mxu0 0
        %486 = vmatpush.bf16.xpose.msra.mxu0 0
        %487 = vmatpush.bf16.xpose.msra.mxu0 0
        %488 = vmatpush.bf16.xpose.msra.mxu0 0
        %489 = vmatpush.bf16.xpose.msra.mxu0 0
        %490 = vmatpush.bf16.xpose.msra.mxu0 0
        %491 = vmatpush.bf16.xpose.msra.mxu0 %v482
        %492 = vmatmul.bf16.gmra.mxu0 %v479
        %v493 = vpop.f32.mrf.mxu0
        %v494 = vadd.f32 0.0, %v493
        %v495 = vpop.f32.mrf.mxu0
        %v496 = vadd.f32 0.0, %v495
        %497 = vdwg.mxu0
        %v498 = vsel %vm463, %v494, -inf
        %v499 = vsel %vm464, %v496, -inf
        %vm500 = vcmask 130048
        %v501 = vsel %vm500, %v498, -inf
        %502 = vmax.xlane.f32.xlu0 %v501
        %v503 = vpop.xlane.xlu0 %502
        %v504 = vsel %vm500, %v499, -inf
        %505 = vmax.xlane.f32.xlu0 %v504
        %v506 = vpop.xlane.xlu0 %505
        %v507 = vsub.f32 %v498, %v503
        %v508 = vsub.f32 %v499, %v506
        %v509 = vmul.f32 %v507, 1.442695
        %v510 = vpow.pop %v509
        %v511 = vmul.f32 %v508, 1.442695
        %v512 = vpow.pop %v511
        %v513 = vsel %vm500, %v510, 0.0
        %514 = vadd.xlane.f32.xlu0 %v513
        %v515 = vpop.xlane.xlu0 %514
        %v516 = vsel %vm500, %v512, 0.0
        %517 = vadd.xlane.f32.xlu0 %v516
        %v518 = vpop.xlane.xlu0 %517
        %v519 = vrcp.pop %v515
        %v520 = vrcp.pop %v518
        %v521 = vmul.f32 %v510, %v519
        %v522 = vmul.f32 %v512, %v520
        %v523 = vpack.c.bf16 %v522, %v521
        %524 = vrot.lane.b32.xlu0 %v474, 64
        %v525 = vpop.permute.xlu0 %524
        %v528 = vsel %vm500, %v523, 0
        %530 = vmatpush.bf16.msra.mxu0 0
        %531 = vmatpush.bf16.msra.mxu0 0
        %532 = vmatpush.bf16.msra.mxu0 0
        %533 = vmatpush.bf16.msra.mxu0 0
        %534 = vmatpush.bf16.msra.mxu0 0
        %535 = vmatpush.bf16.msra.mxu0 0
        %536 = vmatpush.bf16.msra.mxu0 0
        %537 = vmatpush.bf16.msra.mxu0 %v525
        %538 = vmatmul.bf16.gmra.mxu0 %v528
        %v539 = vpop.f32.mrf.mxu0
        %v540 = vadd.f32 0.0, %v539
        %v541 = vpop.f32.mrf.mxu0
        %v542 = vadd.f32 0.0, %v541
        %543 = vdwg.mxu0
        %544 = vrot.lane.b32.xlu0 %v469, 120
        %v545 = vpop.permute.xlu0 %544
        %546 = vrot.lane.b32.xlu0 %v474, 88
        %v547 = vpop.permute.xlu0 %546
        %v549 = vsel %vm477, %v545, 0
        %v552 = vsel %vm477, %v547, 0
        %554 = vmatpush.bf16.xpose.msra.mxu0 0
        %555 = vmatpush.bf16.xpose.msra.mxu0 0
        %556 = vmatpush.bf16.xpose.msra.mxu0 0
        %557 = vmatpush.bf16.xpose.msra.mxu0 0
        %558 = vmatpush.bf16.xpose.msra.mxu0 0
        %559 = vmatpush.bf16.xpose.msra.mxu0 0
        %560 = vmatpush.bf16.xpose.msra.mxu0 0
        %561 = vmatpush.bf16.xpose.msra.mxu0 %v552
        %562 = vmatmul.bf16.gmra.mxu0 %v549
        %v563 = vpop.f32.mrf.mxu0
        %v564 = vadd.f32 0.0, %v563
        %v565 = vpop.f32.mrf.mxu0
        %v566 = vadd.f32 0.0, %v565
        %567 = vdwg.mxu0
        %v568 = vsel %vm463, %v564, -inf
        %v569 = vsel %vm464, %v566, -inf
        %v570 = vsel %vm500, %v568, -inf
        %571 = vmax.xlane.f32.xlu0 %v570
        %v572 = vpop.xlane.xlu0 %571
        %v573 = vsel %vm500, %v569, -inf
        %574 = vmax.xlane.f32.xlu0 %v573
        %v575 = vpop.xlane.xlu0 %574
        %v576 = vsub.f32 %v568, %v572
        %v577 = vsub.f32 %v569, %v575
        %v578 = vmul.f32 %v576, 1.442695
        %v579 = vpow.pop %v578
        %v580 = vmul.f32 %v577, 1.442695
        %v581 = vpow.pop %v580
        %v582 = vsel %vm500, %v579, 0.0
        %583 = vadd.xlane.f32.xlu0 %v582
        %v584 = vpop.xlane.xlu0 %583
        %v585 = vsel %vm500, %v581, 0.0
        %586 = vadd.xlane.f32.xlu0 %v585
        %v587 = vpop.xlane.xlu0 %586
        %v588 = vrcp.pop %v584
        %v589 = vrcp.pop %v587
        %v590 = vmul.f32 %v579, %v588
        %v591 = vmul.f32 %v581, %v589
        %v592 = vpack.c.bf16 %v591, %v590
        %593 = vrot.lane.b32.xlu0 %v474, 56
        %v594 = vpop.permute.xlu0 %593
        %v597 = vsel %vm500, %v592, 0
        %599 = vmatpush.bf16.msra.mxu0 0
        %600 = vmatpush.bf16.msra.mxu0 0
        %601 = vmatpush.bf16.msra.mxu0 0
        %602 = vmatpush.bf16.msra.mxu0 0
        %603 = vmatpush.bf16.msra.mxu0 0
        %604 = vmatpush.bf16.msra.mxu0 0
        %605 = vmatpush.bf16.msra.mxu0 0
        %606 = vmatpush.bf16.msra.mxu0 %v594
        %607 = vmatmul.bf16.gmra.mxu0 %v597
        %v608 = vpop.f32.mrf.mxu0
        %v609 = vadd.f32 0.0, %v608
        %v610 = vpop.f32.mrf.mxu0
        %v611 = vadd.f32 0.0, %v610
        %612 = vdwg.mxu0
        %613 = vrot.lane.b32.xlu0 %v469, 112
        %v614 = vpop.permute.xlu0 %613
        %615 = vrot.lane.b32.xlu0 %v474, 80
        %v616 = vpop.permute.xlu0 %615
        %v618 = vsel %vm477, %v614, 0
        %v621 = vsel %vm477, %v616, 0
        %623 = vmatpush.bf16.xpose.msra.mxu0 0
        %624 = vmatpush.bf16.xpose.msra.mxu0 0
        %625 = vmatpush.bf16.xpose.msra.mxu0 0
        %626 = vmatpush.bf16.xpose.msra.mxu0 0
        %627 = vmatpush.bf16.xpose.msra.mxu0 0
        %628 = vmatpush.bf16.xpose.msra.mxu0 0
        %629 = vmatpush.bf16.xpose.msra.mxu0 0
        %630 = vmatpush.bf16.xpose.msra.mxu0 %v621
        %631 = vmatmul.bf16.gmra.mxu0 %v618
        %v632 = vpop.f32.mrf.mxu0
        %v633 = vadd.f32 0.0, %v632
        %v634 = vpop.f32.mrf.mxu0
        %v635 = vadd.f32 0.0, %v634
        %636 = vdwg.mxu0
        %v637 = vsel %vm463, %v633, -inf
        %v638 = vsel %vm464, %v635, -inf
        %v639 = vsel %vm500, %v637, -inf
        %640 = vmax.xlane.f32.xlu0 %v639
        %v641 = vpop.xlane.xlu0 %640
        %v642 = vsel %vm500, %v638, -inf
        %643 = vmax.xlane.f32.xlu0 %v642
        %v644 = vpop.xlane.xlu0 %643
        %v645 = vsub.f32 %v637, %v641
        %v646 = vsub.f32 %v638, %v644
        %v647 = vmul.f32 %v645, 1.442695
        %v648 = vpow.pop %v647
        %v649 = vmul.f32 %v646, 1.442695
        %v650 = vpow.pop %v649
        %v651 = vsel %vm500, %v648, 0.0
        %652 = vadd.xlane.f32.xlu0 %v651
        %v653 = vpop.xlane.xlu0 %652
        %v654 = vsel %vm500, %v650, 0.0
        %655 = vadd.xlane.f32.xlu0 %v654
        %v656 = vpop.xlane.xlu0 %655
        %v657 = vrcp.pop %v653
        %v658 = vrcp.pop %v656
        %v659 = vmul.f32 %v648, %v657
        %v660 = vmul.f32 %v650, %v658
        %v661 = vpack.c.bf16 %v660, %v659
        %662 = vrot.lane.b32.xlu0 %v474, 48
        %v663 = vpop.permute.xlu0 %662
        %v666 = vsel %vm500, %v661, 0
        %668 = vmatpush.bf16.msra.mxu0 0
        %669 = vmatpush.bf16.msra.mxu0 0
        %670 = vmatpush.bf16.msra.mxu0 0
        %671 = vmatpush.bf16.msra.mxu0 0
        %672 = vmatpush.bf16.msra.mxu0 0
        %673 = vmatpush.bf16.msra.mxu0 0
        %674 = vmatpush.bf16.msra.mxu0 0
        %675 = vmatpush.bf16.msra.mxu0 %v663
        %676 = vmatmul.bf16.gmra.mxu0 %v666
        %v677 = vpop.f32.mrf.mxu0
        %v678 = vadd.f32 0.0, %v677
        %v679 = vpop.f32.mrf.mxu0
        %v680 = vadd.f32 0.0, %v679
        %681 = vdwg.mxu0
        %682 = vrot.lane.b32.xlu0 %v469, 104
        %v683 = vpop.permute.xlu0 %682
        %684 = vrot.lane.b32.xlu0 %v474, 72
        %v685 = vpop.permute.xlu0 %684
        %v687 = vsel %vm477, %v683, 0
        %v690 = vsel %vm477, %v685, 0
        %692 = vmatpush.bf16.xpose.msra.mxu0 0
        %693 = vmatpush.bf16.xpose.msra.mxu0 0
        %694 = vmatpush.bf16.xpose.msra.mxu0 0
        %695 = vmatpush.bf16.xpose.msra.mxu0 0
        %696 = vmatpush.bf16.xpose.msra.mxu0 0
        %697 = vmatpush.bf16.xpose.msra.mxu0 0
        %698 = vmatpush.bf16.xpose.msra.mxu0 0
        %699 = vmatpush.bf16.xpose.msra.mxu0 %v690
        %700 = vmatmul.bf16.gmra.mxu0 %v687
        %v701 = vpop.f32.mrf.mxu0
        %v702 = vadd.f32 0.0, %v701
        %v703 = vpop.f32.mrf.mxu0
        %v704 = vadd.f32 0.0, %v703
        %705 = vdwg.mxu0
        %v706 = vsel %vm463, %v702, -inf
        %v707 = vsel %vm464, %v704, -inf
        %v708 = vsel %vm500, %v706, -inf
        %709 = vmax.xlane.f32.xlu0 %v708
        %v710 = vpop.xlane.xlu0 %709
        %v711 = vsel %vm500, %v707, -inf
        %712 = vmax.xlane.f32.xlu0 %v711
        %v713 = vpop.xlane.xlu0 %712
        %v714 = vsub.f32 %v706, %v710
        %v715 = vsub.f32 %v707, %v713
        %v716 = vmul.f32 %v714, 1.442695
        %v717 = vpow.pop %v716
        %v718 = vmul.f32 %v715, 1.442695
        %v719 = vpow.pop %v718
        %v720 = vsel %vm500, %v717, 0.0
        %721 = vadd.xlane.f32.xlu0 %v720
        %v722 = vpop.xlane.xlu0 %721
        %v723 = vsel %vm500, %v719, 0.0
        %724 = vadd.xlane.f32.xlu0 %v723
        %v725 = vpop.xlane.xlu0 %724
        %v726 = vrcp.pop %v722
        %v727 = vrcp.pop %v725
        %v728 = vmul.f32 %v717, %v726
        %v729 = vmul.f32 %v719, %v727
        %v730 = vpack.c.bf16 %v729, %v728
        %731 = vrot.lane.b32.xlu0 %v474, 40
        %v732 = vpop.permute.xlu0 %731
        %v735 = vsel %vm500, %v730, 0
        %737 = vmatpush.bf16.msra.mxu0 0
        %738 = vmatpush.bf16.msra.mxu0 0
        %739 = vmatpush.bf16.msra.mxu0 0
        %740 = vmatpush.bf16.msra.mxu0 0
        %741 = vmatpush.bf16.msra.mxu0 0
        %742 = vmatpush.bf16.msra.mxu0 0
        %743 = vmatpush.bf16.msra.mxu0 0
        %744 = vmatpush.bf16.msra.mxu0 %v732
        %745 = vmatmul.bf16.gmra.mxu0 %v735
        %v746 = vpop.f32.mrf.mxu0
        %v747 = vadd.f32 0.0, %v746
        %v748 = vpop.f32.mrf.mxu0
        %v749 = vadd.f32 0.0, %v748
        %750 = vdwg.mxu0
        %753 = vrot.lane.b32.xlu0 %v609, 8
        %v754 = vpop.permute.xlu0 %753
        %755 = vrot.lane.b32.xlu0 %v611, 8
        %v756 = vpop.permute.xlu0 %755
        %761 = vrot.lane.b32.xlu0 %v678, 16
        %v762 = vpop.permute.xlu0 %761
        %763 = vrot.lane.b32.xlu0 %v680, 16
        %v764 = vpop.permute.xlu0 %763
        %769 = vrot.lane.b32.xlu0 %v747, 24
        %v770 = vpop.permute.xlu0 %769
        %771 = vrot.lane.b32.xlu0 %v749, 24
        %v772 = vpop.permute.xlu0 %771
        %v775 = vsel %vm477, %v540, %v754
        %v776 = vsel %vm477, %v542, %v756
        %v777 = vsel %vm500, %v775, %v762
        %v778 = vsel %vm500, %v776, %v764
        %vm779 = vcmask 195584
        %v780 = vsel %vm779, %v777, %v770
        %v781 = vsel %vm779, %v778, %v772
        %v782 = vpack.c.bf16 %v781, %v780
        %v783 = vld [vmem:[#allocation8] sm:$0xf]
        %v784 = vld [vmem:[#allocation8 + $0x4] sm:$0xf]
        %v785 = vld [vmem:[#allocation8 + $0x8] sm:$0xf]
        %v786 = vld [vmem:[#allocation8 + $0xc] sm:$0xf]
        %v787 = vld [vmem:[%s6] sm:$0x1]
        %v789 = vperm.slane %v787, 0
        %v795 = vunpack.c.l.b16 %v783
        %v796 = vunpack.c.l.b16 %v784
        %v797 = vunpack.c.l.b16 %v785
        %v798 = vunpack.c.l.b16 %v786
        %v799 = vpack.c.b16 %v796, %v795
        %v800 = vpack.c.b16 %v798, %v797
        %v804 = vsel %vm350, %v782, 0
        %806 = vmatpush.bf16.msra.mxu0 0
        %807 = vmatpush.bf16.msra.mxu0 0
        %808 = vmatpush.bf16.msra.mxu0 0
        %809 = vmatpush.bf16.msra.mxu0 0
        %810 = vmatpush.bf16.msra.mxu0 0
        %811 = vmatpush.bf16.msra.mxu0 0
        %812 = vmatpush.bf16.msra.mxu0 %v800
        %813 = vmatpush.bf16.msra.mxu0 %v799
        %814 = vmatmul.bf16.gmra.mxu0 %v804
        %v815 = vpop.f32.mrf.mxu0
        %v816 = vadd.f32 %v789, %v815
        %v817 = vpop.f32.mrf.mxu0
        %v818 = vadd.f32 %v789, %v817
        %819 = vdwg.mxu0
        %v820 = vadd.f32 %v348, %v816
        %v821 = vadd.f32 %v349, %v818
        %822 = vst.msk [vmem:[%s346] sm:$0xff] %vm350, %v820
        %823 = vst.msk [vmem:[%s346 + $0x8] sm:$0xff] %vm350, %v821
        %s824 = sand.u32 %s186, 1
        %s825 = scalar_lea.sflag [#allocation4], %s824
        %s826 = sand.u32 %s186, 1
        %s827 = smul.addr %s826, 16
        %s828 = scalar_lea.vmem [#allocation10], %s827
        // Predicated region
        $region65: #{tpu_custom_call.1} parent=47 // pred_check
          %p829 = pneg %p196
        $region66: #{tpu_custom_call.1} parent=47 // pred_check_branch
          %831 = sbr.rel (%p829) target = $region68
        $region67: #{tpu_custom_call.1} parent=47 // pred_region
          %833 = vsyncadd %s825, 0
          %s834 = smul.addr %s26, 2
          %s835 = smul.addr %s834, 8
          %s836 = scalar_lea.hbm %s7, %s835
          %s837 = sshll.u32 %s828, 4
          %s838 = int_to_ptr.vmem [resolvable:$true] %s837
          %s839 = sshll.u32 %s836, 4
          %s840 = int_to_ptr.hbm [resolvable:$true] %s839
          %845 = dma.vmem_to_hbm [thread:$0]  %s838, 256, %s840, %s825, 128, 128, 8
        $region68: #{tpu_custom_call.1} parent=47 // pred_fallthru
          _
      $region48: #{tpu_custom_call.1} parent=5 // pred_fallthru
        _
      %p846 = scmp.le.s32.totalorder 2, %s21
      // Predicated region
      $region69: #{tpu_custom_call.1} parent=5 // pred_check
        %p847 = pneg %p846
      $region70: #{tpu_custom_call.1} parent=5 // pred_check_branch
        %849 = sbr.rel (%p847) target = $region72
      $region71: #{tpu_custom_call.1} parent=5 // pred_region
        %s850 = ssub.s32 %s21, 2
        // Predicated region
        $region73: #{tpu_custom_call.1} parent=71 // pred_check
          %p851 = pneg %p202
        $region74: #{tpu_custom_call.1} parent=71 // pred_check_branch
          %853 = sbr.rel (%p851) target = $region76
        $region75: #{tpu_custom_call.1} parent=71 // pred_region
          %s854 = sand.u32 %s187, 1
          %s855 = scalar_lea.sflag [#allocation4], %s854
          %s856 = sand.u32 %s187, 1
          %s857 = smul.addr %s856, 16
          %s858 = scalar_lea.vmem [#allocation10], %s857
          %860 = dma.done %s855, 256
        $region76: #{tpu_custom_call.1} parent=71 // pred_fallthru
          _
      $region72: #{tpu_custom_call.1} parent=5 // pred_fallthru
        _
    $region6: #{tpu_custom_call.1} parent=1 // loop_footer
      %s25 = sadd.s32 1, %s21
    $region7: #{tpu_custom_call.1} parent=1 // loop_footer_branch
      %20 = sbr.rel target = $region3
    $region8: #{tpu_custom_call.1} parent=1 // loop_exit
      _
    %861 = vsyncpa [#allocation3], 1
    %s862 = scalar_lea.sflag [#allocation3], 1
    %863 = vsyncpa %s862, 1
    %864 = vsyncpa [#allocation6], 1
    %865 = vsyncpa [#allocation9], 1
    %866 = vsyncpa [#allocation4], 1
    %s867 = scalar_lea.sflag [#allocation4], 1
    %868 = vsyncpa %s867, 1

</llo_original>
